<compile_context>
chip_gen: v7x
topology: tpu7x:2x2x1
jax: 0.10.0
libtpu: 0.0.40
codegen_flags: <defaults>
</compile_context>

<pallas_src>
import random
import numpy as np
import jax
import jax.numpy as jnp
from jax.experimental import pallas as pl
from jax.experimental.pallas import tpu as pltpu

# ---------------- static module configuration (trace-time constants) ----------
NET_DEPTH = 5
NET_ARCH = [8] * 41
LAYER_TC = [2, 2, 2, 0, 2]            # skip-link count per layer (tc[3]=0 exercises the no-link branch)
ALL_PATH_NUM = [2, 10, 10, 18, 26]    # width of feat_dict[layer_idx] that link indices draw from

# Deterministic link indices (mirrors random.sample in add_link()).
# TODO(synk): matches the original PyTorch model only if that script consumed the
# random.seed(0) sequence in the identical order.
random.seed(0)
LINK_DICT = [random.sample(list(range(ALL_PATH_NUM[i])), LAYER_TC[i]) for i in range(NET_DEPTH)]

# out_dict[i] feature counts: [10, 8, 8, 8, 2]
FOUT_BY_OUT = ([NET_ARCH[0] + LAYER_TC[0]]
               + [NET_ARCH[i] for i in range(1, NET_DEPTH - 1)]
               + [2])
N_IN = 2
N_OUT = FOUT_BY_OUT[NET_DEPTH - 1]


def layer_dims():
    """(in_features, out_features) for every nn.Linear in self.features."""
    dims = [(2, NET_ARCH[0] + LAYER_TC[0])]
    for i in range(NET_DEPTH - 2):
        dims.append((NET_ARCH[i + 1] + LAYER_TC[i + 1], NET_ARCH[i + 1]))
    dims.append((NET_ARCH[NET_DEPTH - 1] + LAYER_TC[NET_DEPTH - 1], 2))
    return dims


# ------------- static feat_dict column bookkeeping + link folding plan ---------
def _feat_cols():
    """feat_dict[j] as a list of (source_out_idx, source_local_col)."""
    cols = [[(0, c) for c in range(FOUT_BY_OUT[0])]]
    for j in range(1, NET_DEPTH - 2):
        cols.append([(j, c) for c in range(FOUT_BY_OUT[j])] + cols[j - 1])
    return cols


_FEAT_COLS = _feat_cols()
for _L in range(2, NET_DEPTH):
    assert len(_FEAT_COLS[_L - 2]) == ALL_PATH_NUM[_L]


def _fold_plan():
    """layer L -> {source_out_idx: [(source_local_col, link_row_in_W), ...]}."""
    plan = {}
    for L in range(2, NET_DEPTH):
        if LAYER_TC[L] == 0:
            continue
        n_main = FOUT_BY_OUT[L - 1]
        per_src = {}
        for j, gcol in enumerate(LINK_DICT[L]):
            src, local = _FEAT_COLS[L - 2][gcol]
            per_src.setdefault(src, []).append((local, n_main + j))
        plan[L] = per_src
    return plan


FOLD_PLAN = _fold_plan()

# ------------------------- parameter slab layout (rows x 128 lanes) ------------
SLAB_ROWS = 128
SLAB_COLS = 128
BIAS_COL = 64                              # bias of layer L lives at (MAIN_OFF[L].., BIAS_COL)
MAIN_OFF = [16 * L for L in range(NET_DEPTH)]
FOLD_OFF = {}
_next_row = 16 * NET_DEPTH
for _L in sorted(FOLD_PLAN):
    FOLD_OFF[_L] = {}
    for _src in sorted(FOLD_PLAN[_L]):
        FOLD_OFF[_L][_src] = _next_row
        _next_row += 8
assert _next_row <= SLAB_ROWS, "slab row budget exceeded"
assert max(fin for fin, _ in layer_dims()) < BIAS_COL, "bias column collides with weights"
assert max(FOUT_BY_OUT) <= 16, "main/fold slots sized for <=16 output features"


def pack_params(ws, bs):
    """Pack all transposed weights, host-folded link weights and biases into one
    zero-padded (128, 128) f32 slab (DMA'd once, VMEM-resident)."""
    dims = layer_dims()
    slab = np.zeros((SLAB_ROWS, SLAB_COLS), dtype=np.float32)
    for L in range(NET_DEPTH):
        w = np.asarray(ws[L], dtype=np.float32)           # (fin, fout)
        b = np.asarray(bs[L], dtype=np.float32).reshape(-1)
        fin, fout = w.shape
        assert (fin, fout) == dims[L] and b.shape == (fout,)
        tc = LAYER_TC[L] if L >= 2 else 0
        n_main = fin - tc
        # transposed main weight (fout, n_main) + bias column
        slab[MAIN_OFF[L]:MAIN_OFF[L] + fout, :n_main] = w[:n_main].T
        slab[MAIN_OFF[L]:MAIN_OFF[L] + fout, BIAS_COL] = b
        # fold each skip-link row of W into a dense (fout, n_src_features) weight
        # acting on the full source activation (zero except the linked columns)
        for src, pairs in FOLD_PLAN.get(L, {}).items():
            off = FOLD_OFF[L][src]
            for local_col, link_row in pairs:
                slab[off:off + fout, local_col] += w[link_row]
    return jnp.asarray(slab)


# ---------------------------------- kernel ------------------------------------
def simplenet_kernel(p_ref, x_ref, o_ref):
    """Whole forward pass for one batch tile, in batch-in-lanes layout.

    p_ref : (128, 128) packed parameter slab (constant index_map -> VMEM-resident)
    x_ref : (2, TB)    transposed inputs (batch on lanes)
    o_ref : (2, TB)    transposed outputs (minimal-width store)
    """
    relu = lambda t: jnp.maximum(t, 0.0)
    f32 = jnp.float32

    def wmat(off, rows, cols):
        return p_ref[off:off + rows, 0:cols]

    def bcol(off, rows):
        return p_ref[off:off + rows, BIAS_COL:BIAS_COL + 1]      # (rows, 1)

    def dense(off, fout, act_t):
        # (fout, fin) @ (fin, TB): batch on the MXU's wide N axis.
        # TODO(synk): benchmark these K<=10 MXU dots against a VPU broadcast-sum
        # (sum_k w[:,k:k+1]*act[k:k+1,:]) once memory-side wins are measured.
        return jnp.dot(wmat(off, fout, act_t.shape[0]), act_t,
                       preferred_element_type=f32)

    x = x_ref[...]                                               # (2, TB)

    # layer 0: K == 2 -> two VPU broadcast-FMAs instead of an MXU pass
    w0 = wmat(MAIN_OFF[0], FOUT_BY_OUT[0], N_IN)                 # (10, 2)
    out0 = relu(w0[:, 0:1] * x[0:1, :] + w0[:, 1:2] * x[1:2, :]
                + bcol(MAIN_OFF[0], FOUT_BY_OUT[0]))             # (10, TB)

    # layer 1
    out1 = dense(MAIN_OFF[1], FOUT_BY_OUT[1], out0) + bcol(MAIN_OFF[1], FOUT_BY_OUT[1])

    outs = [out0, out1]
    relu_cache = {0: out0}    # out0 is already post-ReLU; relu is idempotent

    def act(idx, apply_relu):
        if not apply_relu:
            return outs[idx]
        if idx not in relu_cache:
            relu_cache[idx] = relu(outs[idx])
        return relu_cache[idx]

    for layer_idx in range(NET_DEPTH - 2):
        L = layer_idx + 2
        apply_relu = layer_idx < NET_DEPTH - 3
        fout = FOUT_BY_OUT[L]
        acc = dense(MAIN_OFF[L], fout, act(L - 1, apply_relu))
        # skip-links, pre-folded host-side into dense per-source weights:
        # one small dense dot per (layer, source), no column extraction.
        for src in sorted(FOLD_OFF.get(L, {})):
            acc = acc + dense(FOLD_OFF[L][src], fout, act(src, apply_relu))
        acc = acc + bcol(MAIN_OFF[L], fout)
        outs.append(acc)

    o_ref[...] = outs[NET_DEPTH - 1]                             # (2, TB)


# --------------------------------- wrapper -------------------------------------
def _round_up(a, m):
    return (a + m - 1) // m * m


def simplenet_pallas(x, ws, bs, *, block_b=8192, min_grid_steps=2):
    """x: (B, 2) float32. Returns (B, 2) float32."""
    B = int(x.shape[0])
    lanes_b = _round_up(max(B, 1), 128)              # batch lives on lanes -> 128-multiple
    tb = _round_up(min(block_b, lanes_b), 128)
    # v7x has 2 TensorCores: prefer >= min_grid_steps grid steps when batch allows.
    if lanes_b >= min_grid_steps * 128 and lanes_b // tb < min_grid_steps:
        tb = _round_up(-(-lanes_b // min_grid_steps), 128)
    padded_b = _round_up(lanes_b, tb)
    grid = (padded_b // tb,)

    slab = pack_params(ws, bs)

    # transposed, batch-in-lanes input; pad batch columns only when needed
    xt = jnp.asarray(x, jnp.float32).T               # (2, B)
    if padded_b != B:
        xt = jnp.pad(xt, ((0, 0), (0, padded_b - B)))

    out_t = pl.pallas_call(
        simplenet_kernel,
        out_shape=jax.ShapeDtypeStruct((N_OUT, padded_b), jnp.float32),
        grid_spec=pltpu.PrefetchScalarGridSpec(
            num_scalar_prefetch=0,
            grid=grid,
            in_specs=[
                # parameter slab: constant block index -> DMA'd once, VMEM-resident
                pl.BlockSpec((SLAB_ROWS, SLAB_COLS), lambda i: (0, 0)),
                # batch-tiled (lane-axis) transposed input
                pl.BlockSpec((N_IN, tb), lambda i: (0, i)),
            ],
            out_specs=pl.BlockSpec((N_OUT, tb), lambda i: (0, i)),
        ),
        compiler_params=pltpu.CompilerParams(dimension_semantics=("parallel",)),
    )(slab, xt)

    return out_t[:, :B].T                            # back to (B, 2)


# ---------------------------- pure-JAX reference --------------------------------
def reference_forward(x, ws, bs):
    relu = lambda t: jnp.maximum(t, 0.0)
    lin = lambda inp, i: inp @ ws[i] + bs[i]

    out0 = relu(lin(x, 0))
    out1 = lin(out0, 1)
    out_dict = [out0, out1]
    feat_dict = [out0, jnp.concatenate([out1, out0], axis=1)]
    for layer_idx in range(NET_DEPTH - 2):
        in_features = feat_dict[layer_idx]
        L = layer_idx + 2
        if LAYER_TC[L] > 0:
            sel = in_features[:, jnp.array(LINK_DICT[L])]
            in_tmp = jnp.concatenate([out_dict[layer_idx + 1], sel], axis=1)
        else:
            in_tmp = out_dict[layer_idx + 1]
        out_tmp = lin(relu(in_tmp), L) if layer_idx < NET_DEPTH - 3 else lin(in_tmp, L)
        feat_dict.append(jnp.concatenate([out_tmp, feat_dict[layer_idx + 1]], axis=1))
        out_dict.append(out_tmp)
    return out_dict[NET_DEPTH - 1]


# ----------------------------------- main ---------------------------------------
if __name__ == "__main__":
    key = jax.random.PRNGKey(0)
    dims = layer_dims()

    ws, bs = [], []
    for fin, fout in dims:
        key, kw, kb = jax.random.split(key, 3)
        scale = 1.0 / np.sqrt(fin)
        ws.append(scale * jax.random.normal(kw, (fin, fout), dtype=jnp.float32))
        bs.append(scale * jax.random.normal(kb, (1, fout), dtype=jnp.float32))

    # small batch (single grid step, padded lanes)
    key, kx = jax.random.split(key)
    x = jax.random.normal(kx, (8, 2), dtype=jnp.float32)
    out = jax.block_until_ready(simplenet_pallas(x, ws, bs))
    ref = jax.block_until_ready(reference_forward(x, ws, bs))
    np.testing.assert_allclose(np.asarray(out), np.asarray(ref), rtol=1e-5, atol=1e-5)

    # exercise batch padding + a 2-step "parallel" grid (v7x megacore path)
    key, kx2 = jax.random.split(key)
    x2 = jax.random.normal(kx2, (384, 2), dtype=jnp.float32)
    out2 = jax.block_until_ready(simplenet_pallas(x2, ws, bs))
    ref2 = jax.block_until_ready(reference_forward(x2, ws, bs))
    np.testing.assert_allclose(np.asarray(out2), np.asarray(ref2), rtol=1e-5, atol=1e-5)

    print("KERNEL_OK")
</pallas_src>

<mosaic_0001>
module attributes {stable_mosaic.version = 11 : i64} {
  func.func @simplenet_kernel(%arg0: i32, %arg1: memref<128x128xf32, #tpu.memory_space<vmem>>, %arg2: memref<2x128xf32, #tpu.memory_space<vmem>>, %arg3: memref<2x128xf32, #tpu.memory_space<vmem>>) attributes {dimension_semantics = [#tpu.dimension_semantics<parallel>], iteration_bounds = array<i64: 1>, scalar_prefetch = 0 : i64, scratch_operands = 0 : i64, tpu.core_type = #tpu.core_type<tc>, window_params = [{pipeline_mode = #tpu.pipeline_mode<synchronous>, transform_indices = @transform_0, window_bounds = array<i64: 128, 128>}, {transform_indices = @transform_1, window_bounds = array<i64: 2, 128>}, {transform_indices = @transform_2, window_bounds = array<i64: 2, 128>}]} {
    %c0 = arith.constant 0 : index
    %c0_0 = arith.constant 0 : index
    %0 = vector.load %arg2[%c0, %c0_0] : memref<2x128xf32, #tpu.memory_space<vmem>>, vector<2x128xf32>
    %c0_1 = arith.constant 0 : index
    %c0_2 = arith.constant 0 : index
    %1 = vector.load %arg1[%c0_1, %c0_2] : memref<128x128xf32, #tpu.memory_space<vmem>>, vector<10x2xf32>
    %2 = vector.extract_strided_slice %1 {offsets = [0, 0], sizes = [10, 1], strides = [1, 1]} : vector<10x2xf32> to vector<10x1xf32>
    %3 = vector.extract_strided_slice %0 {offsets = [0, 0], sizes = [1, 128], strides = [1, 1]} : vector<2x128xf32> to vector<1x128xf32>
    %4 = vector.broadcast %2 : vector<10x1xf32> to vector<10x128xf32>
    %5 = vector.broadcast %3 : vector<1x128xf32> to vector<10x128xf32>
    %6 = arith.mulf %4, %5 : vector<10x128xf32>
    %7 = vector.extract_strided_slice %1 {offsets = [0, 1], sizes = [10, 1], strides = [1, 1]} : vector<10x2xf32> to vector<10x1xf32>
    %8 = vector.extract_strided_slice %0 {offsets = [1, 0], sizes = [1, 128], strides = [1, 1]} : vector<2x128xf32> to vector<1x128xf32>
    %9 = vector.broadcast %7 : vector<10x1xf32> to vector<10x128xf32>
    %10 = vector.broadcast %8 : vector<1x128xf32> to vector<10x128xf32>
    %11 = arith.mulf %9, %10 : vector<10x128xf32>
    %12 = arith.addf %6, %11 : vector<10x128xf32>
    %c0_3 = arith.constant 0 : index
    %c64 = arith.constant 64 : index
    %13 = vector.load %arg1[%c0_3, %c64] : memref<128x128xf32, #tpu.memory_space<vmem>>, vector<10x1xf32>
    %14 = vector.broadcast %13 : vector<10x1xf32> to vector<10x128xf32>
    %15 = arith.addf %12, %14 : vector<10x128xf32>
    %cst = arith.constant 0.000000e+00 : f32
    %16 = vector.broadcast %cst : f32 to vector<10x128xf32>
    %17 = arith.maximumf %15, %16 : vector<10x128xf32>
    %c16 = arith.constant 16 : index
    %c0_4 = arith.constant 0 : index
    %18 = vector.load %arg1[%c16, %c0_4] : memref<128x128xf32, #tpu.memory_space<vmem>>, vector<8x10xf32>
    %cst_5 = arith.constant dense<0.000000e+00> : vector<8x128xf32>
    %19 = tpu.matmul %18, %17, %cst_5 {dimension_numbers = #tpu.dot_dimension_numbers<[1], [0], [0], [1], [0, 0, 1, 1], [], []>} : vector<8x10xf32>, vector<10x128xf32>, vector<8x128xf32> -> vector<8x128xf32>
    %c16_6 = arith.constant 16 : index
    %c64_7 = arith.constant 64 : index
    %20 = vector.load %arg1[%c16_6, %c64_7] : memref<128x128xf32, #tpu.memory_space<vmem>>, vector<8x1xf32>
    %21 = vector.broadcast %20 : vector<8x1xf32> to vector<8x128xf32>
    %22 = arith.addf %19, %21 : vector<8x128xf32>
    %cst_8 = arith.constant 0.000000e+00 : f32
    %23 = vector.broadcast %cst_8 : f32 to vector<8x128xf32>
    %24 = arith.maximumf %22, %23 : vector<8x128xf32>
    %c32 = arith.constant 32 : index
    %c0_9 = arith.constant 0 : index
    %25 = vector.load %arg1[%c32, %c0_9] : memref<128x128xf32, #tpu.memory_space<vmem>>, vector<8x8xf32>
    %cst_10 = arith.constant dense<0.000000e+00> : vector<8x128xf32>
    %26 = tpu.matmul %25, %24, %cst_10 {dimension_numbers = #tpu.dot_dimension_numbers<[1], [0], [0], [1], [0, 0, 1, 1], [], []>} : vector<8x8xf32>, vector<8x128xf32>, vector<8x128xf32> -> vector<8x128xf32>
    %c80 = arith.constant 80 : index
    %c0_11 = arith.constant 0 : index
    %27 = vector.load %arg1[%c80, %c0_11] : memref<128x128xf32, #tpu.memory_space<vmem>>, vector<8x10xf32>
    %cst_12 = arith.constant dense<0.000000e+00> : vector<8x128xf32>
    %28 = tpu.matmul %27, %17, %cst_12 {dimension_numbers = #tpu.dot_dimension_numbers<[1], [0], [0], [1], [0, 0, 1, 1], [], []>} : vector<8x10xf32>, vector<10x128xf32>, vector<8x128xf32> -> vector<8x128xf32>
    %29 = arith.addf %26, %28 : vector<8x128xf32>
    %c32_13 = arith.constant 32 : index
    %c64_14 = arith.constant 64 : index
    %30 = vector.load %arg1[%c32_13, %c64_14] : memref<128x128xf32, #tpu.memory_space<vmem>>, vector<8x1xf32>
    %31 = vector.broadcast %30 : vector<8x1xf32> to vector<8x128xf32>
    %32 = arith.addf %29, %31 : vector<8x128xf32>
    %cst_15 = arith.constant 0.000000e+00 : f32
    %33 = vector.broadcast %cst_15 : f32 to vector<8x128xf32>
    %34 = arith.maximumf %32, %33 : vector<8x128xf32>
    %c48 = arith.constant 48 : index
    %c0_16 = arith.constant 0 : index
    %35 = vector.load %arg1[%c48, %c0_16] : memref<128x128xf32, #tpu.memory_space<vmem>>, vector<8x8xf32>
    %cst_17 = arith.constant dense<0.000000e+00> : vector<8x128xf32>
    %36 = tpu.matmul %35, %34, %cst_17 {dimension_numbers = #tpu.dot_dimension_numbers<[1], [0], [0], [1], [0, 0, 1, 1], [], []>} : vector<8x8xf32>, vector<8x128xf32>, vector<8x128xf32> -> vector<8x128xf32>
    %c48_18 = arith.constant 48 : index
    %c64_19 = arith.constant 64 : index
    %37 = vector.load %arg1[%c48_18, %c64_19] : memref<128x128xf32, #tpu.memory_space<vmem>>, vector<8x1xf32>
    %38 = vector.broadcast %37 : vector<8x1xf32> to vector<8x128xf32>
    %39 = arith.addf %36, %38 : vector<8x128xf32>
    %c64_20 = arith.constant 64 : index
    %c0_21 = arith.constant 0 : index
    %40 = vector.load %arg1[%c64_20, %c0_21] : memref<128x128xf32, #tpu.memory_space<vmem>>, vector<2x8xf32>
    %cst_22 = arith.constant dense<0.000000e+00> : vector<2x128xf32>
    %41 = tpu.matmul %40, %39, %cst_22 {dimension_numbers = #tpu.dot_dimension_numbers<[1], [0], [0], [1], [0, 0, 1, 1], [], []>} : vector<2x8xf32>, vector<8x128xf32>, vector<2x128xf32> -> vector<2x128xf32>
    %c88 = arith.constant 88 : index
    %c0_23 = arith.constant 0 : index
    %42 = vector.load %arg1[%c88, %c0_23] : memref<128x128xf32, #tpu.memory_space<vmem>>, vector<2x10xf32>
    %cst_24 = arith.constant dense<0.000000e+00> : vector<2x128xf32>
    %43 = tpu.matmul %42, %17, %cst_24 {dimension_numbers = #tpu.dot_dimension_numbers<[1], [0], [0], [1], [0, 0, 1, 1], [], []>} : vector<2x10xf32>, vector<10x128xf32>, vector<2x128xf32> -> vector<2x128xf32>
    %44 = arith.addf %41, %43 : vector<2x128xf32>
    %c96 = arith.constant 96 : index
    %c0_25 = arith.constant 0 : index
    %45 = vector.load %arg1[%c96, %c0_25] : memref<128x128xf32, #tpu.memory_space<vmem>>, vector<2x8xf32>
    %cst_26 = arith.constant dense<0.000000e+00> : vector<2x128xf32>
    %46 = tpu.matmul %45, %22, %cst_26 {dimension_numbers = #tpu.dot_dimension_numbers<[1], [0], [0], [1], [0, 0, 1, 1], [], []>} : vector<2x8xf32>, vector<8x128xf32>, vector<2x128xf32> -> vector<2x128xf32>
    %47 = arith.addf %44, %46 : vector<2x128xf32>
    %c64_27 = arith.constant 64 : index
    %c64_28 = arith.constant 64 : index
    %48 = vector.load %arg1[%c64_27, %c64_28] : memref<128x128xf32, #tpu.memory_space<vmem>>, vector<2x1xf32>
    %49 = vector.broadcast %48 : vector<2x1xf32> to vector<2x128xf32>
    %50 = arith.addf %47, %49 : vector<2x128xf32>
    %c0_29 = arith.constant 0 : index
    %c0_30 = arith.constant 0 : index
    %51 = vector.load %arg3[%c0_29, %c0_30] : memref<2x128xf32, #tpu.memory_space<vmem>>, vector<2x128xf32>
    tpu.vector_store %arg3[%c0_29, %c0_30], %50 {strides = array<i32>} : memref<2x128xf32, #tpu.memory_space<vmem>>, vector<2x128xf32>,
    return
  }
  func.func @transform_0(%arg0: i32) -> (i32, i32) {
    %c0_i32 = arith.constant 0 : i32
    %c0_i32_0 = arith.constant 0 : i32
    %c0_i32_1 = arith.constant 0 : i32
    return %c0_i32, %c0_i32_0 : i32, i32
  }
  func.func @transform_1(%arg0: i32) -> (i32, i32) {
    %c0_i32 = arith.constant 0 : i32
    %c0_i32_0 = arith.constant 0 : i32
    return %c0_i32, %arg0 : i32, i32
  }
  func.func @transform_2(%arg0: i32) -> (i32, i32) {
    %c0_i32 = arith.constant 0 : i32
    %c0_i32_0 = arith.constant 0 : i32
    return %c0_i32, %arg0 : i32, i32
  }
}

</mosaic_0001>

<llo_original>
// kernel: tpu_custom_call.1
$region0: #{tpu_custom_call.1}
  #allocation0 [shape = 'u32[]', space=smem, size = 0x4, offset = 0x4, fixed_abs, tag = 'smem constant byte address 0x4 - core index']
  #allocation1 [shape = 'u32[144,128]{1,0:T(1,128)}', space=vmem, size = 0x12000, scoped, tag = 'internal scratch']
  %s0 = inlined_call_operand.hbm [shape: f32[128,128], index: 0, kind: input, shape index: {}]
  %s1 = inlined_call_operand.vmem [shape: f32[2,128], index: 1, kind: input, shape index: {}]
  %s2 = inlined_call_operand.hbm [shape: f32[2,128], index: 2, kind: output, shape index: {}]
  %s3 = sld [smem:[#allocation0]]
  $region22: #{tpu_custom_call.1} parent=0
    _
  %s5 = ssub.s32 1, %s3
  %s6 = scalar_select 0, %s5, %s3
  $region1: #{tpu_custom_call.1} parent=0
    #allocation2 [shape = 'u8[65536]{0}', space=vmem, size = 0x10000, scoped, tag = 'input window, operand 0, single buffered']
    #allocation3 [shape = 's32[1]{0}', space=sflag, size = 0x4, scoped, tag = 'scoped memory for tpu_custom_call.1']
    #allocation4 [shape = 's32[1]{0}', space=sflag, size = 0x4, scoped, tag = 'scoped memory for tpu_custom_call.1']
    #allocation5 [shape = 'u8[1024]{0}', space=vmem, size = 0x400, scoped, tag = 'output window, operand 0, single buffered']
    %7 = vsyncpa [#allocation3], 0
    %8 = vsyncpa [#allocation4], 0
    // Predicated region
    $region2: #{tpu_custom_call.1} parent=1 // pred_check
      _
    $region3: #{tpu_custom_call.1} parent=1 // pred_check_branch
      %10 = sbr.rel (0) target = $region5
    $region4: #{tpu_custom_call.1} parent=1 // pred_region
      %s12 = ssub.s32 2048, 2048
      %13 = vsyncadd [#allocation3], %s12
      %s14 = sshll.u32 [#allocation2], 4
      %s15 = int_to_ptr.vmem [resolvable:$true] %s14
      %20 = dma.hbm_to_vmem [thread:$0]  %s0, 2048, %s15, [#allocation3], 128, 128, 8
    $region5: #{tpu_custom_call.1} parent=1 // pred_fallthru
      _
    // Predicated region
    $region6: #{tpu_custom_call.1} parent=1 // pred_check
      _
    $region7: #{tpu_custom_call.1} parent=1 // pred_check_branch
      %22 = sbr.rel (0) target = $region9
    $region8: #{tpu_custom_call.1} parent=1 // pred_region
      _
    $region9: #{tpu_custom_call.1} parent=1 // pred_fallthru
      _
    // Predicated region
    $region10: #{tpu_custom_call.1} parent=1 // pred_check
      _
    $region11: #{tpu_custom_call.1} parent=1 // pred_check_branch
      %24 = sbr.rel (0) target = $region13
    $region12: #{tpu_custom_call.1} parent=1 // pred_region
      %25 = dma.done [#allocation3], 2048
    $region13: #{tpu_custom_call.1} parent=1 // pred_fallthru
      _
    %v26 = vld [vmem:[%s1] sm:$0x3]
    %v27 = vld [vmem:[#allocation2] sm:$0xff]
    %v28 = vld [vmem:[#allocation2 + $0x8] sm:$0x3]
    %30 = vset.pattern.permute.xlu0 0
    %31 = vperm.xlu0 %30, %v27
    %v32 = vpop.permute.xlu0 %31
    %35 = vset.pattern.permute.xlu0 0
    %36 = vperm.xlu0 %35, %v28
    %v37 = vpop.permute.xlu0 %36
    %v39 = vlaneseq
    %v40 = vshrl.u32 %v39, 7
    %v41 = vsub.s32 0, %v40
    %v42 = vrot.slane %v26, %v41
    %v43 = vmul.f32 %v32, %v42
    %v44 = vmul.f32 %v37, %v42
    %45 = vset.pattern.permute.xlu0 1
    %46 = vperm.xlu0 %45, %v27
    %v47 = vpop.permute.xlu0 %46
    %49 = vset.pattern.permute.xlu0 1
    %50 = vperm.xlu0 %49, %v28
    %v51 = vpop.permute.xlu0 %50
    %v53 = vlaneseq
    %v54 = vshrl.u32 %v53, 7
    %v55 = vsub.s32 1, %v54
    %v56 = vrot.slane %v26, %v55
    %v57 = vmul.f32 %v47, %v56
    %v58 = vmul.f32 %v51, %v56
    %v59 = vadd.f32 %v43, %v57
    %v60 = vadd.f32 %v44, %v58
    %61 = vset.pattern.permute.xlu0 64
    %62 = vperm.xlu0 %61, %v27
    %v63 = vpop.permute.xlu0 %62
    %65 = vset.pattern.permute.xlu0 64
    %66 = vperm.xlu0 %65, %v28
    %v67 = vpop.permute.xlu0 %66
    %v69 = vadd.f32 %v59, %v63
    %v70 = vadd.f32 %v60, %v67
    %v71 = vmax.f32 %v69, 0.0
    %v72 = vmax.f32 %v70, 0.0
    %v73 = vld [vmem:[#allocation2 + $0x10] sm:$0xff]
    %75 = vset.pattern.permute.xlu0 64
    %76 = vperm.xlu0 %75, %v73
    %v77 = vpop.permute.xlu0 %76
    %vm79 = vcmask 80896
    %v80 = vsel %vm79, %v73, 0
    %vm82 = vcmask 1041408
    %v84 = vsel %vm82, %v72, 0
    %86 = vmatprep.subr.mxu0 0.0
    %87 = vmatpush1.msra.mxu0 %v71
    %88 = vmatprep.subr.mxu0 0.0
    %89 = vmatpush1.msra.mxu0 %v84
    %90 = vmatprep.subr.mxu0 0.0
    %91 = vmatpush1.msra.mxu0 0.0
    %92 = vmatprep.subr.mxu0 0.0
    %93 = vmatpush1.msra.mxu0 0.0
    %94 = vmatprep.subr.mxu0 0.0
    %95 = vmatpush1.msra.mxu0 0.0
    %96 = vmatprep.subr.mxu0 0.0
    %97 = vmatpush1.msra.mxu0 0.0
    %98 = vmatprep.subr.mxu0 0.0
    %99 = vmatpush1.msra.mxu0 0.0
    %100 = vmatprep.subr.mxu0 0.0
    %101 = vmatpush1.msra.mxu0 0.0
    %102 = vmatprep.subr.mxu0 0.0
    %103 = vmatpush1.msra.mxu0 0.0
    %104 = vmatprep.subr.mxu0 0.0
    %105 = vmatpush1.msra.mxu0 0.0
    %106 = vmatprep.subr.mxu0 0.0
    %107 = vmatpush1.msra.mxu0 0.0
    %108 = vmatprep.subr.mxu0 0.0
    %109 = vmatpush1.msra.mxu0 0.0
    %110 = vmatprep.subr.mxu0 0.0
    %111 = vmatpush1.msra.mxu0 0.0
    %112 = vmatprep.subr.mxu0 0.0
    %113 = vmatpush1.msra.mxu0 0.0
    %114 = vmatprep.subr.mxu0 0.0
    %115 = vmatpush1.msra.mxu0 0.0
    %116 = vmatprep.subr.mxu0 0.0
    %117 = vmatpush1.msra.mxu0 0.0
    %118 = vmatprep.subr.mxu0 0.0
    %119 = vmatpush1.msra.mxu0 0.0
    %120 = vmatprep.subr.mxu0 0.0
    %121 = vmatpush1.msra.mxu0 0.0
    %122 = vmatprep.subr.mxu0 0.0
    %123 = vmatpush1.msra.mxu0 0.0
    %124 = vmatprep.subr.mxu0 0.0
    %125 = vmatpush1.msra.mxu0 0.0
    %126 = vmatprep.subr.mxu0 0.0
    %127 = vmatpush1.msra.mxu0 0.0
    %128 = vmatprep.subr.mxu0 0.0
    %129 = vmatpush1.msra.mxu0 0.0
    %130 = vmatprep.subr.mxu0 0.0
    %131 = vmatpush1.msra.mxu0 0.0
    %132 = vmatprep.subr.mxu0 0.0
    %133 = vmatpush1.msra.mxu0 0.0
    %134 = vmatprep.subr.mxu0 0.0
    %135 = vmatpush1.msra.mxu0 0.0
    %136 = vmatprep.subr.mxu0 0.0
    %137 = vmatpush1.msra.mxu0 0.0
    %138 = vmatprep.subr.mxu0 0.0
    %139 = vmatpush1.msra.mxu0 0.0
    %140 = vmatprep.subr.mxu0 0.0
    %141 = vmatpush1.msra.mxu0 0.0
    %142 = vmatprep.subr.mxu0 0.0
    %143 = vmatpush1.msra.mxu0 0.0
    %144 = vmatprep.subr.mxu0 0.0
    %145 = vmatpush1.msra.mxu0 0.0
    %146 = vmatprep.subr.mxu0 0.0
    %147 = vmatpush1.msra.mxu0 0.0
    %148 = vmatprep.subr.mxu0 0.0
    %149 = vmatpush1.msra.mxu0 0.0
    %150 = vmatprep.mubr.f32.mxu0 0.0
    %151 = vmatmul.mubr.f32.gmra.mrb[0].mxu0 %v80
    %v152 = vpop.f32.mrb[0].mxu0
    %v153 = vadd.f32 %v77, %v152
    %v154 = vpop.f32.mrb[0].mxu0
    %155 = vdwg.mxu0
    %v156 = vmax.f32 %v153, 0.0
    %v157 = vld [vmem:[#allocation2 + $0x20] sm:$0xff]
    %v158 = vld [vmem:[#allocation2 + $0x50] sm:$0xff]
    %v160 = vsel %vm79, %v158, 0
    %162 = vmatprep.subr.mxu0 0.0
    %163 = vmatpush1.msra.mxu0 %v71
    %164 = vmatprep.subr.mxu0 0.0
    %165 = vmatpush1.msra.mxu0 %v84
    %166 = vmatprep.subr.mxu0 0.0
    %167 = vmatpush1.msra.mxu0 0.0
    %168 = vmatprep.subr.mxu0 0.0
    %169 = vmatpush1.msra.mxu0 0.0
    %170 = vmatprep.subr.mxu0 0.0
    %171 = vmatpush1.msra.mxu0 0.0
    %172 = vmatprep.subr.mxu0 0.0
    %173 = vmatpush1.msra.mxu0 0.0
    %174 = vmatprep.subr.mxu0 0.0
    %175 = vmatpush1.msra.mxu0 0.0
    %176 = vmatprep.subr.mxu0 0.0
    %177 = vmatpush1.msra.mxu0 0.0
    %178 = vmatprep.subr.mxu0 0.0
    %179 = vmatpush1.msra.mxu0 0.0
    %180 = vmatprep.subr.mxu0 0.0
    %181 = vmatpush1.msra.mxu0 0.0
    %182 = vmatprep.subr.mxu0 0.0
    %183 = vmatpush1.msra.mxu0 0.0
    %184 = vmatprep.subr.mxu0 0.0
    %185 = vmatpush1.msra.mxu0 0.0
    %186 = vmatprep.subr.mxu0 0.0
    %187 = vmatpush1.msra.mxu0 0.0
    %188 = vmatprep.subr.mxu0 0.0
    %189 = vmatpush1.msra.mxu0 0.0
    %190 = vmatprep.subr.mxu0 0.0
    %191 = vmatpush1.msra.mxu0 0.0
    %192 = vmatprep.subr.mxu0 0.0
    %193 = vmatpush1.msra.mxu0 0.0
    %194 = vmatprep.subr.mxu0 0.0
    %195 = vmatpush1.msra.mxu0 0.0
    %196 = vmatprep.subr.mxu0 0.0
    %197 = vmatpush1.msra.mxu0 0.0
    %198 = vmatprep.subr.mxu0 0.0
    %199 = vmatpush1.msra.mxu0 0.0
    %200 = vmatprep.subr.mxu0 0.0
    %201 = vmatpush1.msra.mxu0 0.0
    %202 = vmatprep.subr.mxu0 0.0
    %203 = vmatpush1.msra.mxu0 0.0
    %204 = vmatprep.subr.mxu0 0.0
    %205 = vmatpush1.msra.mxu0 0.0
    %206 = vmatprep.subr.mxu0 0.0
    %207 = vmatpush1.msra.mxu0 0.0
    %208 = vmatprep.subr.mxu0 0.0
    %209 = vmatpush1.msra.mxu0 0.0
    %210 = vmatprep.subr.mxu0 0.0
    %211 = vmatpush1.msra.mxu0 0.0
    %212 = vmatprep.subr.mxu0 0.0
    %213 = vmatpush1.msra.mxu0 0.0
    %214 = vmatprep.subr.mxu0 0.0
    %215 = vmatpush1.msra.mxu0 0.0
    %216 = vmatprep.subr.mxu0 0.0
    %217 = vmatpush1.msra.mxu0 0.0
    %218 = vmatprep.subr.mxu0 0.0
    %219 = vmatpush1.msra.mxu0 0.0
    %220 = vmatprep.subr.mxu0 0.0
    %221 = vmatpush1.msra.mxu0 0.0
    %222 = vmatprep.subr.mxu0 0.0
    %223 = vmatpush1.msra.mxu0 0.0
    %224 = vmatprep.subr.mxu0 0.0
    %225 = vmatpush1.msra.mxu0 0.0
    %226 = vmatprep.mubr.f32.mxu0 0.0
    %227 = vmatmul.mubr.f32.gmra.mrb[0].mxu0 %v160
    %v228 = vpop.f32.mrb[0].mxu0
    %v229 = vadd.f32 0.0, %v228
    %v230 = vpop.f32.mrb[0].mxu0
    %231 = vdwg.mxu0
    %vm232 = vcmask 64512
    %v234 = vsel %vm232, %v157, 0
    %236 = vmatprep.subr.mxu0 0.0
    %237 = vmatpush1.msra.mxu0 %v156
    %238 = vmatprep.subr.mxu0 0.0
    %239 = vmatpush1.msra.mxu0 0.0
    %240 = vmatprep.subr.mxu0 0.0
    %241 = vmatpush1.msra.mxu0 0.0
    %242 = vmatprep.subr.mxu0 0.0
    %243 = vmatpush1.msra.mxu0 0.0
    %244 = vmatprep.subr.mxu0 0.0
    %245 = vmatpush1.msra.mxu0 0.0
    %246 = vmatprep.subr.mxu0 0.0
    %247 = vmatpush1.msra.mxu0 0.0
    %248 = vmatprep.subr.mxu0 0.0
    %249 = vmatpush1.msra.mxu0 0.0
    %250 = vmatprep.subr.mxu0 0.0
    %251 = vmatpush1.msra.mxu0 0.0
    %252 = vmatprep.subr.mxu0 0.0
    %253 = vmatpush1.msra.mxu0 0.0
    %254 = vmatprep.subr.mxu0 0.0
    %255 = vmatpush1.msra.mxu0 0.0
    %256 = vmatprep.subr.mxu0 0.0
    %257 = vmatpush1.msra.mxu0 0.0
    %258 = vmatprep.subr.mxu0 0.0
    %259 = vmatpush1.msra.mxu0 0.0
    %260 = vmatprep.subr.mxu0 0.0
    %261 = vmatpush1.msra.mxu0 0.0
    %262 = vmatprep.subr.mxu0 0.0
    %263 = vmatpush1.msra.mxu0 0.0
    %264 = vmatprep.subr.mxu0 0.0
    %265 = vmatpush1.msra.mxu0 0.0
    %266 = vmatprep.subr.mxu0 0.0
    %267 = vmatpush1.msra.mxu0 0.0
    %268 = vmatprep.subr.mxu0 0.0
    %269 = vmatpush1.msra.mxu0 0.0
    %270 = vmatprep.subr.mxu0 0.0
    %271 = vmatpush1.msra.mxu0 0.0
    %272 = vmatprep.subr.mxu0 0.0
    %273 = vmatpush1.msra.mxu0 0.0
    %274 = vmatprep.subr.mxu0 0.0
    %275 = vmatpush1.msra.mxu0 0.0
    %276 = vmatprep.subr.mxu0 0.0
    %277 = vmatpush1.msra.mxu0 0.0
    %278 = vmatprep.subr.mxu0 0.0
    %279 = vmatpush1.msra.mxu0 0.0
    %280 = vmatprep.subr.mxu0 0.0
    %281 = vmatpush1.msra.mxu0 0.0
    %282 = vmatprep.subr.mxu0 0.0
    %283 = vmatpush1.msra.mxu0 0.0
    %284 = vmatprep.subr.mxu0 0.0
    %285 = vmatpush1.msra.mxu0 0.0
    %286 = vmatprep.subr.mxu0 0.0
    %287 = vmatpush1.msra.mxu0 0.0
    %288 = vmatprep.subr.mxu0 0.0
    %289 = vmatpush1.msra.mxu0 0.0
    %290 = vmatprep.subr.mxu0 0.0
    %291 = vmatpush1.msra.mxu0 0.0
    %292 = vmatprep.subr.mxu0 0.0
    %293 = vmatpush1.msra.mxu0 0.0
    %294 = vmatprep.subr.mxu0 0.0
    %295 = vmatpush1.msra.mxu0 0.0
    %296 = vmatprep.subr.mxu0 0.0
    %297 = vmatpush1.msra.mxu0 0.0
    %298 = vmatprep.subr.mxu0 0.0
    %299 = vmatpush1.msra.mxu0 0.0
    %300 = vmatprep.mubr.f32.mxu0 0.0
    %301 = vmatmul.mubr.f32.gmra.mrb[0].mxu0 %v234
    %v302 = vpop.f32.mrb[0].mxu0
    %v303 = vadd.f32 %v229, %v302
    %v304 = vpop.f32.mrb[0].mxu0
    %305 = vdwg.mxu0
    %306 = vset.pattern.permute.xlu0 64
    %307 = vperm.xlu0 %306, %v157
    %v308 = vpop.permute.xlu0 %307
    %v310 = vadd.f32 %v303, %v308
    %v311 = vmax.f32 %v310, 0.0
    %v312 = vld [vmem:[#allocation2 + $0x30] sm:$0xff]
    %314 = vset.pattern.permute.xlu0 64
    %315 = vperm.xlu0 %314, %v312
    %v316 = vpop.permute.xlu0 %315
    %v318 = vsel %vm232, %v312, 0
    %320 = vmatprep.subr.mxu0 0.0
    %321 = vmatpush1.msra.mxu0 %v311
    %322 = vmatprep.subr.mxu0 0.0
    %323 = vmatpush1.msra.mxu0 0.0
    %324 = vmatprep.subr.mxu0 0.0
    %325 = vmatpush1.msra.mxu0 0.0
    %326 = vmatprep.subr.mxu0 0.0
    %327 = vmatpush1.msra.mxu0 0.0
    %328 = vmatprep.subr.mxu0 0.0
    %329 = vmatpush1.msra.mxu0 0.0
    %330 = vmatprep.subr.mxu0 0.0
    %331 = vmatpush1.msra.mxu0 0.0
    %332 = vmatprep.subr.mxu0 0.0
    %333 = vmatpush1.msra.mxu0 0.0
    %334 = vmatprep.subr.mxu0 0.0
    %335 = vmatpush1.msra.mxu0 0.0
    %336 = vmatprep.subr.mxu0 0.0
    %337 = vmatpush1.msra.mxu0 0.0
    %338 = vmatprep.subr.mxu0 0.0
    %339 = vmatpush1.msra.mxu0 0.0
    %340 = vmatprep.subr.mxu0 0.0
    %341 = vmatpush1.msra.mxu0 0.0
    %342 = vmatprep.subr.mxu0 0.0
    %343 = vmatpush1.msra.mxu0 0.0
    %344 = vmatprep.subr.mxu0 0.0
    %345 = vmatpush1.msra.mxu0 0.0
    %346 = vmatprep.subr.mxu0 0.0
    %347 = vmatpush1.msra.mxu0 0.0
    %348 = vmatprep.subr.mxu0 0.0
    %349 = vmatpush1.msra.mxu0 0.0
    %350 = vmatprep.subr.mxu0 0.0
    %351 = vmatpush1.msra.mxu0 0.0
    %352 = vmatprep.subr.mxu0 0.0
    %353 = vmatpush1.msra.mxu0 0.0
    %354 = vmatprep.subr.mxu0 0.0
    %355 = vmatpush1.msra.mxu0 0.0
    %356 = vmatprep.subr.mxu0 0.0
    %357 = vmatpush1.msra.mxu0 0.0
    %358 = vmatprep.subr.mxu0 0.0
    %359 = vmatpush1.msra.mxu0 0.0
    %360 = vmatprep.subr.mxu0 0.0
    %361 = vmatpush1.msra.mxu0 0.0
    %362 = vmatprep.subr.mxu0 0.0
    %363 = vmatpush1.msra.mxu0 0.0
    %364 = vmatprep.subr.mxu0 0.0
    %365 = vmatpush1.msra.mxu0 0.0
    %366 = vmatprep.subr.mxu0 0.0
    %367 = vmatpush1.msra.mxu0 0.0
    %368 = vmatprep.subr.mxu0 0.0
    %369 = vmatpush1.msra.mxu0 0.0
    %370 = vmatprep.subr.mxu0 0.0
    %371 = vmatpush1.msra.mxu0 0.0
    %372 = vmatprep.subr.mxu0 0.0
    %373 = vmatpush1.msra.mxu0 0.0
    %374 = vmatprep.subr.mxu0 0.0
    %375 = vmatpush1.msra.mxu0 0.0
    %376 = vmatprep.subr.mxu0 0.0
    %377 = vmatpush1.msra.mxu0 0.0
    %378 = vmatprep.subr.mxu0 0.0
    %379 = vmatpush1.msra.mxu0 0.0
    %380 = vmatprep.subr.mxu0 0.0
    %381 = vmatpush1.msra.mxu0 0.0
    %382 = vmatprep.subr.mxu0 0.0
    %383 = vmatpush1.msra.mxu0 0.0
    %384 = vmatprep.mubr.f32.mxu0 0.0
    %385 = vmatmul.mubr.f32.gmra.mrb[0].mxu0 %v318
    %v386 = vpop.f32.mrb[0].mxu0
    %v387 = vadd.f32 %v316, %v386
    %v388 = vpop.f32.mrb[0].mxu0
    %389 = vdwg.mxu0
    %v390 = vld [vmem:[#allocation2 + $0x40] sm:$0x3]
    %v391 = vld [vmem:[#allocation2 + $0x58] sm:$0x3]
    %v393 = vsel %vm79, %v391, 0
    %395 = vmatprep.subr.mxu0 0.0
    %396 = vmatpush1.msra.mxu0 %v71
    %397 = vmatprep.subr.mxu0 0.0
    %398 = vmatpush1.msra.mxu0 %v84
    %399 = vmatprep.subr.mxu0 0.0
    %400 = vmatpush1.msra.mxu0 0.0
    %401 = vmatprep.subr.mxu0 0.0
    %402 = vmatpush1.msra.mxu0 0.0
    %403 = vmatprep.subr.mxu0 0.0
    %404 = vmatpush1.msra.mxu0 0.0
    %405 = vmatprep.subr.mxu0 0.0
    %406 = vmatpush1.msra.mxu0 0.0
    %407 = vmatprep.subr.mxu0 0.0
    %408 = vmatpush1.msra.mxu0 0.0
    %409 = vmatprep.subr.mxu0 0.0
    %410 = vmatpush1.msra.mxu0 0.0
    %411 = vmatprep.subr.mxu0 0.0
    %412 = vmatpush1.msra.mxu0 0.0
    %413 = vmatprep.subr.mxu0 0.0
    %414 = vmatpush1.msra.mxu0 0.0
    %415 = vmatprep.subr.mxu0 0.0
    %416 = vmatpush1.msra.mxu0 0.0
    %417 = vmatprep.subr.mxu0 0.0
    %418 = vmatpush1.msra.mxu0 0.0
    %419 = vmatprep.subr.mxu0 0.0
    %420 = vmatpush1.msra.mxu0 0.0
    %421 = vmatprep.subr.mxu0 0.0
    %422 = vmatpush1.msra.mxu0 0.0
    %423 = vmatprep.subr.mxu0 0.0
    %424 = vmatpush1.msra.mxu0 0.0
    %425 = vmatprep.subr.mxu0 0.0
    %426 = vmatpush1.msra.mxu0 0.0
    %427 = vmatprep.subr.mxu0 0.0
    %428 = vmatpush1.msra.mxu0 0.0
    %429 = vmatprep.subr.mxu0 0.0
    %430 = vmatpush1.msra.mxu0 0.0
    %431 = vmatprep.subr.mxu0 0.0
    %432 = vmatpush1.msra.mxu0 0.0
    %433 = vmatprep.subr.mxu0 0.0
    %434 = vmatpush1.msra.mxu0 0.0
    %435 = vmatprep.subr.mxu0 0.0
    %436 = vmatpush1.msra.mxu0 0.0
    %437 = vmatprep.subr.mxu0 0.0
    %438 = vmatpush1.msra.mxu0 0.0
    %439 = vmatprep.subr.mxu0 0.0
    %440 = vmatpush1.msra.mxu0 0.0
    %441 = vmatprep.subr.mxu0 0.0
    %442 = vmatpush1.msra.mxu0 0.0
    %443 = vmatprep.subr.mxu0 0.0
    %444 = vmatpush1.msra.mxu0 0.0
    %445 = vmatprep.subr.mxu0 0.0
    %446 = vmatpush1.msra.mxu0 0.0
    %447 = vmatprep.subr.mxu0 0.0
    %448 = vmatpush1.msra.mxu0 0.0
    %449 = vmatprep.subr.mxu0 0.0
    %450 = vmatpush1.msra.mxu0 0.0
    %451 = vmatprep.subr.mxu0 0.0
    %452 = vmatpush1.msra.mxu0 0.0
    %453 = vmatprep.subr.mxu0 0.0
    %454 = vmatpush1.msra.mxu0 0.0
    %455 = vmatprep.subr.mxu0 0.0
    %456 = vmatpush1.msra.mxu0 0.0
    %457 = vmatprep.subr.mxu0 0.0
    %458 = vmatpush1.msra.mxu0 0.0
    %459 = vmatprep.mubr.f32.mxu0 0.0
    %460 = vmatmul.mubr.f32.gmra.mrb[0].mxu0 %v393
    %v461 = vpop.f32.mrb[0].mxu0
    %v462 = vadd.f32 0.0, %v461
    %v463 = vpop.f32.mrb[0].mxu0
    %464 = vdwg.mxu0
    %v466 = vsel %vm232, %v390, 0
    %468 = vmatprep.subr.mxu0 0.0
    %469 = vmatpush1.msra.mxu0 %v387
    %470 = vmatprep.subr.mxu0 0.0
    %471 = vmatpush1.msra.mxu0 0.0
    %472 = vmatprep.subr.mxu0 0.0
    %473 = vmatpush1.msra.mxu0 0.0
    %474 = vmatprep.subr.mxu0 0.0
    %475 = vmatpush1.msra.mxu0 0.0
    %476 = vmatprep.subr.mxu0 0.0
    %477 = vmatpush1.msra.mxu0 0.0
    %478 = vmatprep.subr.mxu0 0.0
    %479 = vmatpush1.msra.mxu0 0.0
    %480 = vmatprep.subr.mxu0 0.0
    %481 = vmatpush1.msra.mxu0 0.0
    %482 = vmatprep.subr.mxu0 0.0
    %483 = vmatpush1.msra.mxu0 0.0
    %484 = vmatprep.subr.mxu0 0.0
    %485 = vmatpush1.msra.mxu0 0.0
    %486 = vmatprep.subr.mxu0 0.0
    %487 = vmatpush1.msra.mxu0 0.0
    %488 = vmatprep.subr.mxu0 0.0
    %489 = vmatpush1.msra.mxu0 0.0
    %490 = vmatprep.subr.mxu0 0.0
    %491 = vmatpush1.msra.mxu0 0.0
    %492 = vmatprep.subr.mxu0 0.0
    %493 = vmatpush1.msra.mxu0 0.0
    %494 = vmatprep.subr.mxu0 0.0
    %495 = vmatpush1.msra.mxu0 0.0
    %496 = vmatprep.subr.mxu0 0.0
    %497 = vmatpush1.msra.mxu0 0.0
    %498 = vmatprep.subr.mxu0 0.0
    %499 = vmatpush1.msra.mxu0 0.0
    %500 = vmatprep.subr.mxu0 0.0
    %501 = vmatpush1.msra.mxu0 0.0
    %502 = vmatprep.subr.mxu0 0.0
    %503 = vmatpush1.msra.mxu0 0.0
    %504 = vmatprep.subr.mxu0 0.0
    %505 = vmatpush1.msra.mxu0 0.0
    %506 = vmatprep.subr.mxu0 0.0
    %507 = vmatpush1.msra.mxu0 0.0
    %508 = vmatprep.subr.mxu0 0.0
    %509 = vmatpush1.msra.mxu0 0.0
    %510 = vmatprep.subr.mxu0 0.0
    %511 = vmatpush1.msra.mxu0 0.0
    %512 = vmatprep.subr.mxu0 0.0
    %513 = vmatpush1.msra.mxu0 0.0
    %514 = vmatprep.subr.mxu0 0.0
    %515 = vmatpush1.msra.mxu0 0.0
    %516 = vmatprep.subr.mxu0 0.0
    %517 = vmatpush1.msra.mxu0 0.0
    %518 = vmatprep.subr.mxu0 0.0
    %519 = vmatpush1.msra.mxu0 0.0
    %520 = vmatprep.subr.mxu0 0.0
    %521 = vmatpush1.msra.mxu0 0.0
    %522 = vmatprep.subr.mxu0 0.0
    %523 = vmatpush1.msra.mxu0 0.0
    %524 = vmatprep.subr.mxu0 0.0
    %525 = vmatpush1.msra.mxu0 0.0
    %526 = vmatprep.subr.mxu0 0.0
    %527 = vmatpush1.msra.mxu0 0.0
    %528 = vmatprep.subr.mxu0 0.0
    %529 = vmatpush1.msra.mxu0 0.0
    %530 = vmatprep.subr.mxu0 0.0
    %531 = vmatpush1.msra.mxu0 0.0
    %532 = vmatprep.mubr.f32.mxu0 0.0
    %533 = vmatmul.mubr.f32.gmra.mrb[0].mxu0 %v466
    %v534 = vpop.f32.mrb[0].mxu0
    %v535 = vadd.f32 %v462, %v534
    %v536 = vpop.f32.mrb[0].mxu0
    %537 = vdwg.mxu0
    %v538 = vld [vmem:[#allocation2 + $0x60] sm:$0x3]
    %v540 = vsel %vm232, %v538, 0
    %542 = vmatprep.subr.mxu0 0.0
    %543 = vmatpush1.msra.mxu0 %v153
    %544 = vmatprep.subr.mxu0 0.0
    %545 = vmatpush1.msra.mxu0 0.0
    %546 = vmatprep.subr.mxu0 0.0
    %547 = vmatpush1.msra.mxu0 0.0
    %548 = vmatprep.subr.mxu0 0.0
    %549 = vmatpush1.msra.mxu0 0.0
    %550 = vmatprep.subr.mxu0 0.0
    %551 = vmatpush1.msra.mxu0 0.0
    %552 = vmatprep.subr.mxu0 0.0
    %553 = vmatpush1.msra.mxu0 0.0
    %554 = vmatprep.subr.mxu0 0.0
    %555 = vmatpush1.msra.mxu0 0.0
    %556 = vmatprep.subr.mxu0 0.0
    %557 = vmatpush1.msra.mxu0 0.0
    %558 = vmatprep.subr.mxu0 0.0
    %559 = vmatpush1.msra.mxu0 0.0
    %560 = vmatprep.subr.mxu0 0.0
    %561 = vmatpush1.msra.mxu0 0.0
    %562 = vmatprep.subr.mxu0 0.0
    %563 = vmatpush1.msra.mxu0 0.0
    %564 = vmatprep.subr.mxu0 0.0
    %565 = vmatpush1.msra.mxu0 0.0
    %566 = vmatprep.subr.mxu0 0.0
    %567 = vmatpush1.msra.mxu0 0.0
    %568 = vmatprep.subr.mxu0 0.0
    %569 = vmatpush1.msra.mxu0 0.0
    %570 = vmatprep.subr.mxu0 0.0
    %571 = vmatpush1.msra.mxu0 0.0
    %572 = vmatprep.subr.mxu0 0.0
    %573 = vmatpush1.msra.mxu0 0.0
    %574 = vmatprep.subr.mxu0 0.0
    %575 = vmatpush1.msra.mxu0 0.0
    %576 = vmatprep.subr.mxu0 0.0
    %577 = vmatpush1.msra.mxu0 0.0
    %578 = vmatprep.subr.mxu0 0.0
    %579 = vmatpush1.msra.mxu0 0.0
    %580 = vmatprep.subr.mxu0 0.0
    %581 = vmatpush1.msra.mxu0 0.0
    %582 = vmatprep.subr.mxu0 0.0
    %583 = vmatpush1.msra.mxu0 0.0
    %584 = vmatprep.subr.mxu0 0.0
    %585 = vmatpush1.msra.mxu0 0.0
    %586 = vmatprep.subr.mxu0 0.0
    %587 = vmatpush1.msra.mxu0 0.0
    %588 = vmatprep.subr.mxu0 0.0
    %589 = vmatpush1.msra.mxu0 0.0
    %590 = vmatprep.subr.mxu0 0.0
    %591 = vmatpush1.msra.mxu0 0.0
    %592 = vmatprep.subr.mxu0 0.0
    %593 = vmatpush1.msra.mxu0 0.0
    %594 = vmatprep.subr.mxu0 0.0
    %595 = vmatpush1.msra.mxu0 0.0
    %596 = vmatprep.subr.mxu0 0.0
    %597 = vmatpush1.msra.mxu0 0.0
    %598 = vmatprep.subr.mxu0 0.0
    %599 = vmatpush1.msra.mxu0 0.0
    %600 = vmatprep.subr.mxu0 0.0
    %601 = vmatpush1.msra.mxu0 0.0
    %602 = vmatprep.subr.mxu0 0.0
    %603 = vmatpush1.msra.mxu0 0.0
    %604 = vmatprep.subr.mxu0 0.0
    %605 = vmatpush1.msra.mxu0 0.0
    %606 = vmatprep.mubr.f32.mxu0 0.0
    %607 = vmatmul.mubr.f32.gmra.mrb[0].mxu0 %v540
    %v608 = vpop.f32.mrb[0].mxu0
    %v609 = vadd.f32 0.0, %v608
    %v610 = vpop.f32.mrb[0].mxu0
    %611 = vdwg.mxu0
    %v612 = vadd.f32 %v535, %v609
    %613 = vset.pattern.permute.xlu0 64
    %614 = vperm.xlu0 %613, %v390
    %v615 = vpop.permute.xlu0 %614
    %v617 = vadd.f32 %v612, %v615
    %618 = vst [vmem:[#allocation5] sm:$0x3] %v617
    // Predicated region
    $region14: #{tpu_custom_call.1} parent=1 // pred_check
      _
    $region15: #{tpu_custom_call.1} parent=1 // pred_check_branch
      %620 = sbr.rel (0) target = $region17
    $region16: #{tpu_custom_call.1} parent=1 // pred_region
      %s622 = ssub.s32 32, 32
      %623 = vsyncadd [#allocation4], %s622
      %s625 = sshll.u32 [#allocation5], 4
      %s626 = int_to_ptr.vmem [resolvable:$true] %s625
      %628 = dma.vmem_to_hbm [thread:$0]  %s626, 32, %s2, [#allocation4]
    $region17: #{tpu_custom_call.1} parent=1 // pred_fallthru
      _
    // Predicated region
    $region18: #{tpu_custom_call.1} parent=1 // pred_check
      _
    $region19: #{tpu_custom_call.1} parent=1 // pred_check_branch
      %630 = sbr.rel (0) target = $region21
    $region20: #{tpu_custom_call.1} parent=1 // pred_region
      %631 = dma.done [#allocation4], 32
    $region21: #{tpu_custom_call.1} parent=1 // pred_fallthru
      _
    %632 = vsyncpa [#allocation3], 1
    %633 = vsyncpa [#allocation4], 1

</llo_original>
